<compile_context>
chip_gen: v7x
topology: tpu7x:2x2x1
jax: 0.10.0
libtpu: 0.0.40
codegen_flags: <defaults>
</compile_context>

<pallas_src>
import math
from functools import partial

import jax
import jax.numpy as jnp
from jax.experimental import pallas as pl
from jax.experimental.pallas import tpu as pltpu


def _default_vmem_limit():
    # v5e/v6e: 128 MiB physical -> 96 MiB scoped; v7x: 64 MiB physical -> 48 MiB scoped.
    try:
        cap = int(pltpu.get_tpu_info().vmem_capacity_bytes)
        return min(cap * 3 // 4, 96 * 1024 * 1024)
    except Exception:
        return 48 * 1024 * 1024


VMEM_LIMIT = _default_vmem_limit()


def _tile(dim, target, quantum):
    """Largest tile <= target that divides dim and is a multiple of quantum, else full dim."""
    # TODO(synk): falls back to the full dim for prime/unaligned dims instead of padding;
    # all BERT shapes (768/3072/512-multiples) divide cleanly so this never triggers here.
    if dim <= target:
        return dim
    t = (target // quantum) * quantum
    while t >= quantum:
        if dim % t == 0:
            return t
        t -= quantum
    return dim


# ----------------------------------------------------------------------------
# Tiled linear (optionally fused activation)
# ----------------------------------------------------------------------------
def _linear_kernel(x_ref, w_ref, b_ref, o_ref, acc_ref, *, activation):
    k = pl.program_id(2)

    @pl.when(k == 0)
    def _():
        acc_ref[...] = jnp.zeros(acc_ref.shape, jnp.float32)

    acc_ref[...] += jnp.dot(
        x_ref[...].astype(jnp.bfloat16),
        w_ref[...].astype(jnp.bfloat16),
        preferred_element_type=jnp.float32,
    )

    @pl.when(k == pl.num_programs(2) - 1)
    def _():
        y = acc_ref[...] + b_ref[...].astype(jnp.float32)
        if activation == "tanh":
            y = jnp.tanh(y)
        elif activation == "gelu":
            # TODO(synk): HF BERT default is erf-GELU; tanh approximation used (Mosaic-safe).
            c = math.sqrt(2.0 / math.pi)
            y = 0.5 * y * (1.0 + jnp.tanh(c * (y + 0.044715 * (y ** 3))))
        o_ref[...] = y.astype(o_ref.dtype)


def linear_pallas(x, w, b, activation=None, out_dtype=jnp.bfloat16,
                  tm=512, tn=512, tk=1024):
    """y = act(x @ w + b). x:(M,K) w:(K,N) b:(N,). bf16 MXU inputs, fp32 accumulator."""
    M, K = x.shape
    N = w.shape[1]
    tm = _tile(M, tm, 16)   # bf16 packs 16 rows per vreg -> 16-row sublane quantum
    tn = _tile(N, tn, 128)
    tk = _tile(K, tk, 128)
    b2 = b.reshape(1, N).astype(jnp.float32)
    return pl.pallas_call(
        partial(_linear_kernel, activation=activation),
        out_shape=jax.ShapeDtypeStruct((M, N), out_dtype),
        grid=(M // tm, N // tn, K // tk),
        in_specs=[
            pl.BlockSpec((tm, tk), lambda i, j, k: (i, k)),
            pl.BlockSpec((tk, tn), lambda i, j, k: (k, j)),
            # k-invariant block index -> no re-DMA across the k axis
            pl.BlockSpec((1, tn), lambda i, j, k: (0, j)),
        ],
        out_specs=pl.BlockSpec((tm, tn), lambda i, j, k: (i, j)),
        scratch_shapes=[pltpu.VMEM((tm, tn), jnp.float32)],
        compiler_params=pltpu.CompilerParams(
            dimension_semantics=("parallel", "parallel", "arbitrary"),
            vmem_limit_bytes=VMEM_LIMIT,
        ),
    )(x, w, b2)


# ----------------------------------------------------------------------------
# Fused linear + residual add + LayerNorm (matmul epilogue fusion)
# ----------------------------------------------------------------------------
def _linear_res_ln_kernel(x_ref, w_ref, b_ref, r_ref, g_ref, be_ref, o_ref, acc_ref, *, eps):
    k = pl.program_id(1)

    @pl.when(k == 0)
    def _():
        acc_ref[...] = jnp.zeros(acc_ref.shape, jnp.float32)

    acc_ref[...] += jnp.dot(
        x_ref[...].astype(jnp.bfloat16),
        w_ref[...].astype(jnp.bfloat16),
        preferred_element_type=jnp.float32,
    )

    @pl.when(k == pl.num_programs(1) - 1)
    def _():
        y = acc_ref[...] + b_ref[...].astype(jnp.float32) + r_ref[...].astype(jnp.float32)
        mean = jnp.mean(y, axis=-1, keepdims=True)
        var = jnp.mean(jnp.square(y - mean), axis=-1, keepdims=True)
        y = (y - mean) * jax.lax.rsqrt(var + eps)
        y = y * g_ref[...].astype(jnp.float32) + be_ref[...].astype(jnp.float32)
        o_ref[...] = y.astype(o_ref.dtype)


def linear_residual_layernorm_pallas(x, w, b, res, gamma, beta, eps=1e-12,
                                     out_dtype=jnp.bfloat16, tm=512, tk=1024):
    """LayerNorm(x @ w + b + res). Full-N blocks so LN stats are computed in one tile."""
    M, K = x.shape
    N = w.shape[1]
    tm = _tile(M, tm, 16)
    tk = _tile(K, tk, 128)
    b2 = b.reshape(1, N).astype(jnp.float32)
    return pl.pallas_call(
        partial(_linear_res_ln_kernel, eps=eps),
        out_shape=jax.ShapeDtypeStruct((M, N), out_dtype),
        grid=(M // tm, K // tk),
        in_specs=[
            pl.BlockSpec((tm, tk), lambda i, k: (i, k)),
            pl.BlockSpec((tk, N), lambda i, k: (k, 0)),
            # the four blocks below are k-invariant -> not re-DMA'd across k
            pl.BlockSpec((1, N), lambda i, k: (0, 0)),
            pl.BlockSpec((tm, N), lambda i, k: (i, 0)),
            pl.BlockSpec((1, N), lambda i, k: (0, 0)),
            pl.BlockSpec((1, N), lambda i, k: (0, 0)),
        ],
        out_specs=pl.BlockSpec((tm, N), lambda i, k: (i, 0)),
        scratch_shapes=[pltpu.VMEM((tm, N), jnp.float32)],
        compiler_params=pltpu.CompilerParams(
            dimension_semantics=("parallel", "arbitrary"),
            vmem_limit_bytes=VMEM_LIMIT,
        ),
    )(x, w, b2, res, gamma, beta)


# ----------------------------------------------------------------------------
# Fused embedding sum + LayerNorm (word gather stays in XLA; adds + LN fused here)
# ----------------------------------------------------------------------------
def _embed_layernorm_kernel(we_ref, pb_ref, g_ref, b_ref, o_ref, *, eps):
    x = we_ref[...].astype(jnp.float32) + pb_ref[...].astype(jnp.float32)
    mean = jnp.mean(x, axis=-1, keepdims=True)
    var = jnp.mean(jnp.square(x - mean), axis=-1, keepdims=True)
    y = (x - mean) * jax.lax.rsqrt(var + eps)
    o_ref[...] = (y * g_ref[...].astype(jnp.float32)
                  + b_ref[...].astype(jnp.float32)).astype(o_ref.dtype)


def embed_layernorm_pallas(word_e, posbias, gamma, beta, eps=1e-12, out_dtype=jnp.bfloat16):
    """LayerNorm(word_e[b, s] + posbias[s]). word_e:(B,S,H) fp32, posbias:(S,H) fp32."""
    B, S, H = word_e.shape
    ts = _tile(S, 512, 8)
    return pl.pallas_call(
        partial(_embed_layernorm_kernel, eps=eps),
        out_shape=jax.ShapeDtypeStruct((B, S, H), out_dtype),
        grid=(B, S // ts),
        in_specs=[
            pl.BlockSpec((None, ts, H), lambda b, s: (b, s, 0)),
            pl.BlockSpec((ts, H), lambda b, s: (s, 0)),
            pl.BlockSpec((1, H), lambda b, s: (0, 0)),
            pl.BlockSpec((1, H), lambda b, s: (0, 0)),
        ],
        out_specs=pl.BlockSpec((None, ts, H), lambda b, s: (b, s, 0)),
        compiler_params=pltpu.CompilerParams(
            dimension_semantics=("parallel", "parallel"),
            vmem_limit_bytes=VMEM_LIMIT,
        ),
    )(word_e, posbias, gamma, beta)


# ----------------------------------------------------------------------------
# Attention over the fused QKV tile: grid (B,), single kv pass (S <= chunksize),
# in-kernel unrolled head loop, lane-dense (S, H) context output.
# ----------------------------------------------------------------------------
def _attention_kernel(qkv_ref, bias_ref, o_ref, *, n_heads, head_dim, hidden, scale):
    bias = bias_ref[...].astype(jnp.float32)          # (1, S) additive mask bias
    outs = []
    for h in range(n_heads):                          # unrolled; static lane offsets
        q0 = h * head_dim
        k0 = hidden + h * head_dim
        v0 = 2 * hidden + h * head_dim
        # pre-scale Q (tq x Dh elements) instead of scaling the (S, S) score tile
        q = (qkv_ref[:, q0:q0 + head_dim].astype(jnp.float32) * scale).astype(jnp.bfloat16)
        k = qkv_ref[:, k0:k0 + head_dim]
        v = qkv_ref[:, v0:v0 + head_dim]
        s = jax.lax.dot_general(q, k, (((1,), (1,)), ((), ())),
                                preferred_element_type=jnp.float32)    # (S, S)
        s = s + bias
        m = jnp.max(s, axis=-1, keepdims=True)
        p = jnp.exp(s - m)
        denom = jnp.sum(p, axis=-1, keepdims=True)
        ctx = jnp.dot(p.astype(jnp.bfloat16), v, preferred_element_type=jnp.float32)
        outs.append(ctx * pl.reciprocal(denom, approx=True))
    # one lane-dense (S, H) store instead of per-head Dh-wide masked stores
    o_ref[...] = jnp.concatenate(outs, axis=-1).astype(o_ref.dtype)


def attention_pallas(qkv, bias3, n_heads, head_dim, hidden, scale):
    """qkv:(B, S, 3H) bf16 (fused QKV GEMM output); bias3:(B, 1, S) fp32 additive mask."""
    B, S, threeH = qkv.shape
    return pl.pallas_call(
        partial(_attention_kernel, n_heads=n_heads, head_dim=head_dim,
                hidden=hidden, scale=scale),
        out_shape=jax.ShapeDtypeStruct((B, S, hidden), jnp.bfloat16),
        grid=(B,),
        in_specs=[
            pl.BlockSpec((None, S, threeH), lambda b: (b, 0, 0)),
            pl.BlockSpec((None, 1, S), lambda b: (b, 0, 0)),
        ],
        out_specs=pl.BlockSpec((None, S, hidden), lambda b: (b, 0, 0)),
        compiler_params=pltpu.CompilerParams(
            dimension_semantics=("parallel",),
            vmem_limit_bytes=VMEM_LIMIT,
        ),
    )(qkv, bias3)


# ----------------------------------------------------------------------------
# Small BERT encoder built from the kernels above
# ----------------------------------------------------------------------------
def _normal(key, shape, scale=0.02, dtype=jnp.float32):
    return (scale * jax.random.normal(key, shape, dtype=jnp.float32)).astype(dtype)


def init_params(key, vocab, max_pos, H, L, n_heads, inter, task_classes):
    ks = iter(jax.random.split(key, 8 + 4 * L + 2 * len(task_classes)))
    p = {
        "word_emb": _normal(next(ks), (vocab, H)),
        "pos_emb": _normal(next(ks), (max_pos, H)),
        "type_emb": _normal(next(ks), (2, H)),
        "emb_ln_g": jnp.ones((1, H), jnp.float32),
        "emb_ln_b": jnp.zeros((1, H), jnp.float32),
        "pool_w": _normal(next(ks), (H, H), dtype=jnp.bfloat16),
        "pool_b": jnp.zeros((H,), jnp.float32),
        "layers": [],
        "n_heads": n_heads,
    }
    for _ in range(L):
        lp = {
            # fused Q/K/V projection: columns [0:H]=Q, [H:2H]=K, [2H:3H]=V
            "qkv_w": _normal(next(ks), (H, 3 * H), dtype=jnp.bfloat16),
            "qkv_b": jnp.zeros((3 * H,), jnp.float32),
            "ao_w": _normal(next(ks), (H, H), dtype=jnp.bfloat16),
            "ao_b": jnp.zeros((H,), jnp.float32),
            "ln1_g": jnp.ones((1, H), jnp.float32), "ln1_b": jnp.zeros((1, H), jnp.float32),
            "i_w": _normal(next(ks), (H, inter), dtype=jnp.bfloat16),
            "i_b": jnp.zeros((inter,), jnp.float32),
            "o_w": _normal(next(ks), (inter, H), dtype=jnp.bfloat16),
            "o_b": jnp.zeros((H,), jnp.float32),
            "ln2_g": jnp.ones((1, H), jnp.float32), "ln2_b": jnp.zeros((1, H), jnp.float32),
        }
        p["layers"].append(lp)
    # batched task heads: one (H, sum(classes)) GEMM; per-task column segments recorded
    fc_ws, fc_bs, segments, start = [], [], {}, 0
    for task, c in task_classes.items():
        fc_ws.append(_normal(next(ks), (H, c)))
        fc_bs.append(_normal(next(ks), (c,)))
        segments[task] = (start, c)
        start += c
    p["fc_w_cat"] = jnp.concatenate(fc_ws, axis=1).astype(jnp.bfloat16)
    p["fc_b_cat"] = jnp.concatenate(fc_bs, axis=0).astype(jnp.float32)
    p["fc_segments"] = segments
    return p


def encoder_layer(lp, x2, bias3, B, S, n_heads):
    H = lp["qkv_w"].shape[0]
    Dh = H // n_heads

    # fused QKV projection: reads x2 once, one large-N GEMM -> (B*S, 3H) bf16
    qkv = linear_pallas(x2, lp["qkv_w"], lp["qkv_b"])
    # reshape is free (no transpose): attention consumes the fused layout directly
    ctx = attention_pallas(qkv.reshape(B, S, 3 * H), bias3, n_heads, Dh, H,
                           scale=1.0 / math.sqrt(Dh))              # (B, S, H) bf16

    # attention output projection + residual + LayerNorm fused into one kernel
    x2 = linear_residual_layernorm_pallas(ctx.reshape(B * S, H), lp["ao_w"], lp["ao_b"],
                                          x2, lp["ln1_g"], lp["ln1_b"])

    inter = linear_pallas(x2, lp["i_w"], lp["i_b"], activation="gelu")
    # FFN output projection + residual + LayerNorm fused into one kernel
    x2 = linear_residual_layernorm_pallas(inter, lp["o_w"], lp["o_b"],
                                          x2, lp["ln2_g"], lp["ln2_b"])
    return x2


def bert_pooled(params, input_ids, mask):
    B, S = input_ids.shape
    H = params["word_emb"].shape[1]
    n_heads = params["n_heads"]

    # embeddings: token gather is XLA glue; pos+type bias precomputed once (S x H),
    # the adds and LayerNorm are fused in a single Pallas kernel.
    word_e = params["word_emb"][input_ids]                                    # (B,S,H) fp32
    posbias = params["pos_emb"][:S] + params["type_emb"][0][None, :]          # (S,H) fp32
    x = embed_layernorm_pallas(word_e, posbias, params["emb_ln_g"], params["emb_ln_b"])
    x2 = x.reshape(B * S, H)

    # additive attention mask bias hoisted once for all layers: (mask-1)*1e9, (B,1,S)
    bias3 = ((mask.astype(jnp.float32) - 1.0) * 1e9).reshape(B, 1, S)

    for lp in params["layers"]:
        x2 = encoder_layer(lp, x2, bias3, B, S, n_heads)

    cls = x2.reshape(B, S, H)[:, 0, :]
    pooled = linear_pallas(cls, params["pool_w"], params["pool_b"], activation="tanh")
    return pooled


def mtkb_longbert_forward(params, input_ids, mask, chunksize=512):
    """Short-document path of MTKB_LongBERT.forward (seq <= chunksize)."""
    assert input_ids.shape[1] <= chunksize, "only the seq<=chunksize path is implemented"
    pooled = bert_pooled(params, input_ids, mask)
    # nn.Dropout in eval mode: identity.
    # all task heads in ONE GEMM; per-task log-softmax on (B, n_classes) is trivial XLA glue
    logits_all = linear_pallas(pooled, params["fc_w_cat"], params["fc_b_cat"],
                               out_dtype=jnp.float32)
    fw_outputs = {}
    for task, (start, size) in params["fc_segments"].items():
        fw_outputs[task] = jax.nn.log_softmax(logits_all[:, start:start + size], axis=1)
    return fw_outputs


# ----------------------------------------------------------------------------
# Demo
# ----------------------------------------------------------------------------
if __name__ == "__main__":
    B, S = 2, 8
    VOCAB, MAX_POS, H, L, N_HEADS, INTER = 64, 16, 32, 2, 4, 64
    CHUNKSIZE = 512
    task_classes = {"sentiment": 4, "topic": 3}

    root = jax.random.PRNGKey(0)
    k_params, k_ids = jax.random.split(root)
    params = init_params(k_params, VOCAB, MAX_POS, H, L, N_HEADS, INTER, task_classes)

    input_ids = jax.random.randint(k_ids, (B, S), 0, VOCAB, dtype=jnp.int32)
    mask = jnp.array(
        [[1, 1, 1, 1, 1, 1, 1, 1],
         [1, 1, 1, 1, 1, 0, 0, 0]], dtype=jnp.int32
    )

    outs = mtkb_longbert_forward(params, input_ids, mask, chunksize=CHUNKSIZE)
    outs = jax.block_until_ready(outs)

    # sanity: each task output is (B, n_classes) of log-probs summing to ~1 after exp
    for task, n_cls in task_classes.items():
        assert outs[task].shape == (B, n_cls)
        assert bool(jnp.all(jnp.isfinite(outs[task])))
        assert bool(jnp.allclose(jnp.sum(jnp.exp(outs[task]), axis=1), 1.0, atol=1e-3))

    print("KERNEL_OK")
</pallas_src>

<mosaic_0001>
module attributes {stable_mosaic.version = 11 : i64} {
  func.func @_embed_layernorm_kernel(%arg0: i32, %arg1: i32, %arg2: memref<1x8x32xf32, #tpu.memory_space<vmem>>, %arg3: memref<8x32xf32, #tpu.memory_space<vmem>>, %arg4: memref<1x32xf32, #tpu.memory_space<vmem>>, %arg5: memref<1x32xf32, #tpu.memory_space<vmem>>, %arg6: memref<1x8x32xbf16, #tpu.memory_space<vmem>>) attributes {dimension_semantics = [#tpu.dimension_semantics<parallel>, #tpu.dimension_semantics<parallel>], iteration_bounds = array<i64: 2, 1>, scalar_prefetch = 0 : i64, scratch_operands = 0 : i64, tpu.core_type = #tpu.core_type<tc>, window_params = [{transform_indices = @transform_0, window_bounds = array<i64: 1, 8, 32>}, {transform_indices = @transform_1, window_bounds = array<i64: 8, 32>}, {pipeline_mode = #tpu.pipeline_mode<synchronous>, transform_indices = @transform_2, window_bounds = array<i64: 1, 32>}, {pipeline_mode = #tpu.pipeline_mode<synchronous>, transform_indices = @transform_3, window_bounds = array<i64: 1, 32>}, {transform_indices = @transform_4, window_bounds = array<i64: 1, 8, 32>}]} {
    %c0 = arith.constant 0 : index
    %c0_0 = arith.constant 0 : index
    %c0_1 = arith.constant 0 : index
    %0 = vector.load %arg2[%c0, %c0_0, %c0_1] : memref<1x8x32xf32, #tpu.memory_space<vmem>>, vector<1x8x32xf32>
    %1 = vector.shape_cast %0 : vector<1x8x32xf32> to vector<8x32xf32>
    %c0_2 = arith.constant 0 : index
    %c0_3 = arith.constant 0 : index
    %2 = vector.load %arg3[%c0_2, %c0_3] : memref<8x32xf32, #tpu.memory_space<vmem>>, vector<8x32xf32>
    %3 = arith.addf %1, %2 : vector<8x32xf32>
    %cst = arith.constant dense<0.000000e+00> : vector<8xf32>
    %4 = vector.multi_reduction <add>, %3, %cst [1] : vector<8x32xf32> to vector<8xf32>
    %5 = vector.shape_cast %4 : vector<8xf32> to vector<8x1xf32>
    %cst_4 = arith.constant 3.200000e+01 : f32
    %6 = vector.broadcast %cst_4 : f32 to vector<8x1xf32>
    %7 = arith.divf %5, %6 : vector<8x1xf32>
    %8 = vector.broadcast %7 : vector<8x1xf32> to vector<8x32xf32>
    %9 = arith.subf %3, %8 : vector<8x32xf32>
    %10 = arith.mulf %9, %9 : vector<8x32xf32>
    %cst_5 = arith.constant dense<0.000000e+00> : vector<8xf32>
    %11 = vector.multi_reduction <add>, %10, %cst_5 [1] : vector<8x32xf32> to vector<8xf32>
    %12 = vector.shape_cast %11 : vector<8xf32> to vector<8x1xf32>
    %cst_6 = arith.constant 3.200000e+01 : f32
    %13 = vector.broadcast %cst_6 : f32 to vector<8x1xf32>
    %14 = arith.divf %12, %13 : vector<8x1xf32>
    %15 = vector.broadcast %7 : vector<8x1xf32> to vector<8x32xf32>
    %16 = arith.subf %3, %15 : vector<8x32xf32>
    %cst_7 = arith.constant 9.99999996E-13 : f32
    %17 = vector.broadcast %cst_7 : f32 to vector<8x1xf32>
    %18 = arith.addf %14, %17 : vector<8x1xf32>
    %19 = math.rsqrt %18 : vector<8x1xf32>
    %20 = vector.broadcast %19 : vector<8x1xf32> to vector<8x32xf32>
    %21 = arith.mulf %16, %20 : vector<8x32xf32>
    %c0_8 = arith.constant 0 : index
    %c0_9 = arith.constant 0 : index
    %22 = vector.load %arg4[%c0_8, %c0_9] : memref<1x32xf32, #tpu.memory_space<vmem>>, vector<1x32xf32>
    %23 = vector.broadcast %22 : vector<1x32xf32> to vector<8x32xf32>
    %24 = arith.mulf %21, %23 : vector<8x32xf32>
    %c0_10 = arith.constant 0 : index
    %c0_11 = arith.constant 0 : index
    %25 = vector.load %arg5[%c0_10, %c0_11] : memref<1x32xf32, #tpu.memory_space<vmem>>, vector<1x32xf32>
    %26 = vector.broadcast %25 : vector<1x32xf32> to vector<8x32xf32>
    %27 = arith.addf %24, %26 : vector<8x32xf32>
    %28 = arith.truncf %27 : vector<8x32xf32> to vector<8x32xbf16>
    %c0_12 = arith.constant 0 : index
    %c0_13 = arith.constant 0 : index
    %c0_14 = arith.constant 0 : index
    %29 = vector.load %arg6[%c0_12, %c0_13, %c0_14] : memref<1x8x32xbf16, #tpu.memory_space<vmem>>, vector<1x8x32xbf16>
    %30 = vector.shape_cast %29 : vector<1x8x32xbf16> to vector<8x32xbf16>
    %31 = vector.shape_cast %28 : vector<8x32xbf16> to vector<1x8x32xbf16>
    tpu.vector_store %arg6[%c0_12, %c0_13, %c0_14], %31 {strides = array<i32>} : memref<1x8x32xbf16, #tpu.memory_space<vmem>>, vector<1x8x32xbf16>,
    return
  }
  func.func @transform_0(%arg0: i32, %arg1: i32) -> (i32, i32, i32) {
    %c0_i32 = arith.constant 0 : i32
    %c0_i32_0 = arith.constant 0 : i32
    return %arg0, %arg1, %c0_i32 : i32, i32, i32
  }
  func.func @transform_1(%arg0: i32, %arg1: i32) -> (i32, i32) {
    %c0_i32 = arith.constant 0 : i32
    %c0_i32_0 = arith.constant 0 : i32
    return %arg1, %c0_i32 : i32, i32
  }
  func.func @transform_2(%arg0: i32, %arg1: i32) -> (i32, i32) {
    %c0_i32 = arith.constant 0 : i32
    %c0_i32_0 = arith.constant 0 : i32
    %c0_i32_1 = arith.constant 0 : i32
    return %c0_i32, %c0_i32_0 : i32, i32
  }
  func.func @transform_3(%arg0: i32, %arg1: i32) -> (i32, i32) {
    %c0_i32 = arith.constant 0 : i32
    %c0_i32_0 = arith.constant 0 : i32
    %c0_i32_1 = arith.constant 0 : i32
    return %c0_i32, %c0_i32_0 : i32, i32
  }
  func.func @transform_4(%arg0: i32, %arg1: i32) -> (i32, i32, i32) {
    %c0_i32 = arith.constant 0 : i32
    %c0_i32_0 = arith.constant 0 : i32
    return %arg0, %arg1, %c0_i32 : i32, i32, i32
  }
}

</mosaic_0001>

<llo_original>
// kernel: tpu_custom_call.1
$region0: #{tpu_custom_call.1}
  #allocation0 [shape = 'u32[]', space=smem, size = 0x4, offset = 0x4, fixed_abs, tag = 'smem constant byte address 0x4 - core index']
  #allocation1 [shape = 'u32[144,128]{1,0:T(1,128)}', space=vmem, size = 0x12000, scoped, tag = 'internal scratch']
  %s0 = inlined_call_operand.hbm [shape: f32[2,8,32], index: 0, kind: input, shape index: {}]
  %s1 = inlined_call_operand.hbm [shape: f32[8,32], index: 1, kind: input, shape index: {}]
  %s2 = inlined_call_operand.vmem [shape: f32[1,32], index: 2, kind: input, shape index: {}]
  %s3 = inlined_call_operand.vmem [shape: f32[1,32], index: 3, kind: input, shape index: {}]
  %s4 = inlined_call_operand.hbm [shape: bf16[2,8,32], index: 4, kind: output, shape index: {}]
  %s5 = sld [smem:[#allocation0]]
  $region57: #{tpu_custom_call.1} parent=0
    _
  %s7 = ssub.s32 1, %s5
  %s8 = scalar_select 0, %s7, %s5
  $region1: #{tpu_custom_call.1} parent=0
    #allocation2 [shape = 'u8[8192]{0}', space=vmem, size = 0x2000, scoped, tag = 'input window, operand 0']
    #allocation3 [shape = 's32[2]{0}', space=sflag, size = 0x8, scoped, tag = 'scoped memory for tpu_custom_call.1']
    #allocation4 [shape = 's32[2]{0}', space=sflag, size = 0x8, scoped, tag = 'scoped memory for tpu_custom_call.1']
    #allocation5 [shape = 'u8[4096]{0}', space=vmem, size = 0x1000, scoped, tag = 'input window, operand 1, single buffered']
    #allocation6 [shape = 's32[1]{0}', space=sflag, size = 0x4, scoped, tag = 'scoped memory for tpu_custom_call.1']
    #allocation7 [shape = 'u8[4096]{0}', space=vmem, size = 0x1000, scoped, tag = 'output window, operand 0']
    %9 = vsyncpa [#allocation3], 0
    %s10 = scalar_lea.sflag [#allocation3], 1
    %11 = vsyncpa %s10, 0
    %12 = vsyncpa [#allocation6], 0
    %13 = vsyncpa [#allocation4], 0
    %s14 = scalar_lea.sflag [#allocation4], 1
    %15 = vsyncpa %s14, 0
    loop: start=0, step=1, limit=4
    $region2: #{tpu_custom_call.1} parent=1 // loop_pre_header
      _
    $region3: #{tpu_custom_call.1} parent=1 // loop_header
      %s17 = sphi 0, %s21
      %p18 = scmp.ge.s32.totalorder %s17, 4
      %s24 = sphi 0, %s36
      %s25 = sphi 0, %s32
      %s26 = sphi 0, %s24
      %s27 = sphi 0, %s25
      %s28 = sphi 0, %s26
      %s29 = sphi 0, %s27
      %s41 = sphi 0, %s43
      %s44 = sphi 0, %s41
      %s45 = sphi 0, %s44
      %s61 = sphi 0, %s45
      %s67 = sphi 0, %s69
      %s70 = sphi 0, %s67
      %s71 = sphi 0, %s70
      %s87 = sphi 0, %s71
      %s91 = sphi 0, %s91
      %s93 = sphi 0, %s91
      %s94 = sphi 0, %s93
      %s108 = sphi 0, %s94
      %s112 = sphi 0, %s112
      %s114 = sphi 0, %s112
      %s115 = sphi 0, %s114
      %s129 = sphi 0, %s115
      %s137 = sphi 0, %s139
      %s140 = sphi 0, %s137
      %s141 = sphi 0, %s140
      %s157 = sphi 0, %s141
    $region4: #{tpu_custom_call.1} parent=1 // loop_header_branch
      %20 = sbr.rel (%p18) target = $region8
    $region5: #{tpu_custom_call.1} parent=1 // loop_body
      %s22 = ssub.s32 %s17, 1
      %s23 = ssub.s32 %s17, 2
      %s30 = sadd.s32 1, %s25
      %p31 = scmp.ge.s32.totalorder %s30, 1
      %s32 = scalar_select %p31, 0, %s30
      %s33 = sadd.s32 1, %s24
      %s34 = scalar_select %p31, %s33, %s24
      %p35 = scmp.ge.s32.totalorder %s34, 2
      %s36 = scalar_select %p35, 0, %s34
      %s37 = ssub.s32 %s24, %s36
      %s38 = ssub.s32 %s25, %s32
      %s39 = sor.u32 %s37, %s38
      %p40 = scmp.eq.s32.totalorder %s39, 0
      %s42 = sadd.s32 %s41, 1
      %s43 = scalar_select %p40, %s41, %s42
      %p46 = pneg %p40
      %p47 = scmp.eq.s32.totalorder %s17, 1
      %p48 = por %p46, %p47
      %p49 = scmp.ne.s32.totalorder %s41, %s44
      %p50 = scmp.eq.s32.totalorder %s17, 0
      %p51 = por %p49, %p50
      %p52 = scmp.ne.s32.totalorder %s41, %s44
      %p53 = scmp.eq.s32.totalorder %s22, 1
      %p54 = por %p52, %p53
      %p55 = scmp.ne.s32.totalorder %s44, %s45
      %p56 = scmp.eq.s32.totalorder %s22, 0
      %p57 = por %p55, %p56
      %p58 = scmp.ne.s32.totalorder %s44, %s45
      %p59 = scmp.eq.s32.totalorder %s23, 1
      %p60 = por %p58, %p59
      %p62 = scmp.ne.s32.totalorder %s45, %s61
      %p63 = scmp.eq.s32.totalorder %s23, 0
      %p64 = por %p62, %p63
      %s65 = ssub.s32 %s25, %s32
      %p66 = scmp.eq.s32.totalorder %s65, 0
      %s68 = sadd.s32 %s67, 1
      %s69 = scalar_select %p66, %s67, %s68
      %p72 = pneg %p66
      %p73 = scmp.eq.s32.totalorder %s17, 1
      %p74 = por %p72, %p73
      %p75 = scmp.ne.s32.totalorder %s67, %s70
      %p76 = scmp.eq.s32.totalorder %s17, 0
      %p77 = por %p75, %p76
      %p78 = scmp.ne.s32.totalorder %s67, %s70
      %p79 = scmp.eq.s32.totalorder %s22, 1
      %p80 = por %p78, %p79
      %p81 = scmp.ne.s32.totalorder %s70, %s71
      %p82 = scmp.eq.s32.totalorder %s22, 0
      %p83 = por %p81, %p82
      %p84 = scmp.ne.s32.totalorder %s70, %s71
      %p85 = scmp.eq.s32.totalorder %s23, 1
      %p86 = por %p84, %p85
      %p88 = scmp.ne.s32.totalorder %s71, %s87
      %p89 = scmp.eq.s32.totalorder %s23, 0
      %p90 = por %p88, %p89
      %s92 = sadd.s32 %s91, 1
      %p95 = scmp.eq.s32.totalorder %s17, 1
      %p96 = scmp.ne.s32.totalorder %s91, %s93
      %p97 = scmp.eq.s32.totalorder %s17, 0
      %p98 = por %p96, %p97
      %p99 = scmp.ne.s32.totalorder %s91, %s93
      %p100 = scmp.eq.s32.totalorder %s22, 1
      %p101 = por %p99, %p100
      %p102 = scmp.ne.s32.totalorder %s93, %s94
      %p103 = scmp.eq.s32.totalorder %s22, 0
      %p104 = por %p102, %p103
      %p105 = scmp.ne.s32.totalorder %s93, %s94
      %p106 = scmp.eq.s32.totalorder %s23, 1
      %p107 = por %p105, %p106
      %p109 = scmp.ne.s32.totalorder %s94, %s108
      %p110 = scmp.eq.s32.totalorder %s23, 0
      %p111 = por %p109, %p110
      %s113 = sadd.s32 %s112, 1
      %p116 = scmp.eq.s32.totalorder %s17, 1
      %p117 = scmp.ne.s32.totalorder %s112, %s114
      %p118 = scmp.eq.s32.totalorder %s17, 0
      %p119 = por %p117, %p118
      %p120 = scmp.ne.s32.totalorder %s112, %s114
      %p121 = scmp.eq.s32.totalorder %s22, 1
      %p122 = por %p120, %p121
      %p123 = scmp.ne.s32.totalorder %s114, %s115
      %p124 = scmp.eq.s32.totalorder %s22, 0
      %p125 = por %p123, %p124
      %p126 = scmp.ne.s32.totalorder %s114, %s115
      %p127 = scmp.eq.s32.totalorder %s23, 1
      %p128 = por %p126, %p127
      %p130 = scmp.ne.s32.totalorder %s115, %s129
      %p131 = scmp.eq.s32.totalorder %s23, 0
      %p132 = por %p130, %p131
      %s133 = ssub.s32 %s24, %s36
      %s134 = ssub.s32 %s25, %s32
      %s135 = sor.u32 %s133, %s134
      %p136 = scmp.eq.s32.totalorder %s135, 0
      %s138 = sadd.s32 %s137, 1
      %s139 = scalar_select %p136, %s137, %s138
      %p142 = pneg %p136
      %p143 = scmp.eq.s32.totalorder %s17, 1
      %p144 = por %p142, %p143
      %p145 = scmp.ne.s32.totalorder %s137, %s140
      %p146 = scmp.eq.s32.totalorder %s17, 0
      %p147 = por %p145, %p146
      %p148 = scmp.ne.s32.totalorder %s137, %s140
      %p149 = scmp.eq.s32.totalorder %s22, 1
      %p150 = por %p148, %p149
      %p151 = scmp.ne.s32.totalorder %s140, %s141
      %p152 = scmp.eq.s32.totalorder %s22, 0
      %p153 = por %p151, %p152
      %p154 = scmp.ne.s32.totalorder %s140, %s141
      %p155 = scmp.eq.s32.totalorder %s23, 1
      %p156 = por %p154, %p155
      %p158 = scmp.ne.s32.totalorder %s141, %s157
      %p159 = scmp.eq.s32.totalorder %s23, 0
      %p160 = por %p158, %p159
      %p161 = scmp.le.s32.totalorder 1, %s17
      %p162 = scmp.lt.s32.totalorder %s17, 3
      %p163 = pnand %p161, %p162
      %p164 = pneg %p163
      // Predicated region
      $region9: #{tpu_custom_call.1} parent=5 // pred_check
        _
      $region10: #{tpu_custom_call.1} parent=5 // pred_check_branch
        %166 = sbr.rel (%p163) target = $region12
      $region11: #{tpu_custom_call.1} parent=5 // pred_region
        %s167 = ssub.s32 %s17, 1
        // Predicated region
        $region13: #{tpu_custom_call.1} parent=11 // pred_check
          %p168 = pneg %p83
        $region14: #{tpu_custom_call.1} parent=11 // pred_check_branch
          %170 = sbr.rel (%p168) target = $region16
        $region15: #{tpu_custom_call.1} parent=11 // pred_region
          %s172 = ssub.s32 128, 128
          %173 = vsyncadd [#allocation6], %s172
          %s174 = smul.addr %s27, 128
          %s175 = scalar_lea.hbm %s1, %s174
          %s177 = sshll.u32 [#allocation5], 4
          %s178 = int_to_ptr.vmem [resolvable:$true] %s177
          %180 = dma.hbm_to_vmem [thread:$0]  %s175, 128, %s178, [#allocation6]
        $region16: #{tpu_custom_call.1} parent=11 // pred_fallthru
          _
        // Predicated region
        $region17: #{tpu_custom_call.1} parent=11 // pred_check
          %p181 = pneg %p104
        $region18: #{tpu_custom_call.1} parent=11 // pred_check_branch
          %183 = sbr.rel (%p181) target = $region20
        $region19: #{tpu_custom_call.1} parent=11 // pred_region
          _
        $region20: #{tpu_custom_call.1} parent=11 // pred_fallthru
          _
        // Predicated region
        $region21: #{tpu_custom_call.1} parent=11 // pred_check
          %p184 = pneg %p125
        $region22: #{tpu_custom_call.1} parent=11 // pred_check_branch
          %186 = sbr.rel (%p184) target = $region24
        $region23: #{tpu_custom_call.1} parent=11 // pred_region
          _
        $region24: #{tpu_custom_call.1} parent=11 // pred_fallthru
          _
      $region12: #{tpu_custom_call.1} parent=5 // pred_fallthru
        _
      %p187 = scmp.lt.s32.totalorder %s17, 2
      // Predicated region
      $region25: #{tpu_custom_call.1} parent=5 // pred_check
        %p188 = pneg %p187
      $region26: #{tpu_custom_call.1} parent=5 // pred_check_branch
        %190 = sbr.rel (%p188) target = $region28
      $region27: #{tpu_custom_call.1} parent=5 // pred_region
        // Predicated region
        $region29: #{tpu_custom_call.1} parent=27 // pred_check
          %p191 = pneg %p51
        $region30: #{tpu_custom_call.1} parent=27 // pred_check_branch
          %193 = sbr.rel (%p191) target = $region32
        $region31: #{tpu_custom_call.1} parent=27 // pred_region
          %s194 = sand.u32 %s41, 1
          %s195 = scalar_lea.sflag [#allocation3], %s194
          %s196 = sand.u32 %s41, 1
          %s197 = smul.addr %s196, 8
          %s198 = scalar_lea.vmem [#allocation2], %s197
          %s200 = ssub.s32 128, 128
          %201 = vsyncadd %s195, %s200
          %s202 = sadd.s32 %s25, %s24
          %s203 = smul.addr %s202, 128
          %s204 = scalar_lea.hbm %s0, %s203
          %s206 = sshll.u32 %s198, 4
          %s207 = int_to_ptr.vmem [resolvable:$true] %s206
          %209 = dma.hbm_to_vmem [thread:$0]  %s204, 128, %s207, %s195
        $region32: #{tpu_custom_call.1} parent=27 // pred_fallthru
          _
      $region28: #{tpu_custom_call.1} parent=5 // pred_fallthru
        _
      %p210 = scmp.le.s32.totalorder 1, %s17
      %p211 = scmp.lt.s32.totalorder %s17, 3
      %p212 = pnand %p210, %p211
      %p213 = pneg %p212
      // Predicated region
      $region33: #{tpu_custom_call.1} parent=5 // pred_check
        _
      $region34: #{tpu_custom_call.1} parent=5 // pred_check_branch
        %215 = sbr.rel (%p212) target = $region36
      $region35: #{tpu_custom_call.1} parent=5 // pred_region
        %s216 = ssub.s32 %s17, 1
        %s217 = sand.u32 %s44, 1
        %s218 = scalar_lea.sflag [#allocation3], %s217
        %s219 = sand.u32 %s44, 1
        %s220 = smul.addr %s219, 8
        %s221 = scalar_lea.vmem [#allocation2], %s220
        // Predicated region
        $region37: #{tpu_custom_call.1} parent=35 // pred_check
          %p222 = pneg %p57
        $region38: #{tpu_custom_call.1} parent=35 // pred_check_branch
          %224 = sbr.rel (%p222) target = $region40
        $region39: #{tpu_custom_call.1} parent=35 // pred_region
          %225 = dma.done %s218, 128
        $region40: #{tpu_custom_call.1} parent=35 // pred_fallthru
          _
        // Predicated region
        $region41: #{tpu_custom_call.1} parent=35 // pred_check
          %p226 = pneg %p83
        $region42: #{tpu_custom_call.1} parent=35 // pred_check_branch
          %228 = sbr.rel (%p226) target = $region44
        $region43: #{tpu_custom_call.1} parent=35 // pred_region
          %229 = dma.done [#allocation6], 128
        $region44: #{tpu_custom_call.1} parent=35 // pred_fallthru
          _
        %s230 = sand.u32 %s44, 1
        %s231 = scalar_lea.sflag [#allocation3], %s230
        %s232 = sand.u32 %s44, 1
        %s233 = smul.addr %s232, 8
        %s234 = scalar_lea.vmem [#allocation2], %s233
        %p235 = pneg %p57
        %p236 = pneg %p54
        %p237 = pneg %p83
        %p238 = pneg %p80
        %p239 = pneg %p104
        %p240 = pneg %p101
        %p241 = pneg %p125
        %p242 = pneg %p122
        %p243 = pneg %p153
        %p244 = pneg %p150
        %s245 = sand.u32 %s140, 1
        %s246 = scalar_lea.sflag [#allocation4], %s245
        %s247 = sand.u32 %s140, 1
        %s248 = smul.addr %s247, 4
        %s249 = scalar_lea.vmem [#allocation7], %s248
        %v250 = vld [vmem:[%s221] sm:$0xff]
        %v251 = vld [vmem:[#allocation5] sm:$0xff]
        %v252 = vadd.f32 %v250, %v251
        %vm253 = vcmask 261120
        %v254 = vsel %vm253, %v252, 0.0
        %255 = vadd.xlane.f32.xlu0 %v254
        %v256 = vpop.xlane.xlu0 %255
        %v257 = vrcp.pop 32.0
        %v258 = vmul.f32 %v256, %v257
        %v259 = vsub.f32 %v252, %v258
        %v260 = vmul.f32 %v259, %v259
        %v261 = vsel %vm253, %v260, 0.0
        %262 = vadd.xlane.f32.xlu0 %v261
        %v263 = vpop.xlane.xlu0 %262
        %v264 = vmul.f32 %v263, %v257
        %v265 = vadd.f32 %v264, 1e-12
        %v266 = vrsqrt.pop %v265
        %v267 = vmul.f32 %v259, %v266
        %v268 = vld [vmem:[%s2] sm:$0x1]
        %v270 = vlaneseq
        %v271 = vshrl.u32 %v270, 7
        %v272 = vsub.s32 0, %v271
        %v273 = vrot.slane %v268, %v272
        %v275 = vmul.f32 %v267, %v273
        %v276 = vld [vmem:[%s3] sm:$0x1]
        %v278 = vlaneseq
        %v279 = vshrl.u32 %v278, 7
        %v280 = vsub.s32 0, %v279
        %v281 = vrot.slane %v276, %v280
        %v283 = vadd.f32 %v275, %v281
        %v284 = vpack.c.bf16 %v283, %v283
        %vm285 = vcmask 257024
        %286 = vst.msk [vmem:[%s249] sm:$0xf] %vm285, %v284
        %s287 = sand.u32 %s140, 1
        %s288 = scalar_lea.sflag [#allocation4], %s287
        %s289 = sand.u32 %s140, 1
        %s290 = smul.addr %s289, 4
        %s291 = scalar_lea.vmem [#allocation7], %s290
        // Predicated region
        $region45: #{tpu_custom_call.1} parent=35 // pred_check
          %p292 = pneg %p150
        $region46: #{tpu_custom_call.1} parent=35 // pred_check_branch
          %294 = sbr.rel (%p292) target = $region48
        $region47: #{tpu_custom_call.1} parent=35 // pred_region
          %s296 = ssub.s32 64, 64
          %297 = vsyncadd %s288, %s296
          %s298 = sadd.s32 %s27, %s26
          %s299 = smul.addr %s298, 64
          %s300 = scalar_lea.hbm %s4, %s299
          %s302 = sshll.u32 %s291, 4
          %s303 = int_to_ptr.vmem [resolvable:$true] %s302
          %305 = dma.vmem_to_hbm [thread:$0]  %s303, 64, %s300, %s288
        $region48: #{tpu_custom_call.1} parent=35 // pred_fallthru
          _
      $region36: #{tpu_custom_call.1} parent=5 // pred_fallthru
        _
      %p306 = scmp.le.s32.totalorder 2, %s17
      // Predicated region
      $region49: #{tpu_custom_call.1} parent=5 // pred_check
        %p307 = pneg %p306
      $region50: #{tpu_custom_call.1} parent=5 // pred_check_branch
        %309 = sbr.rel (%p307) target = $region52
      $region51: #{tpu_custom_call.1} parent=5 // pred_region
        %s310 = ssub.s32 %s17, 2
        // Predicated region
        $region53: #{tpu_custom_call.1} parent=51 // pred_check
          %p311 = pneg %p156
        $region54: #{tpu_custom_call.1} parent=51 // pred_check_branch
          %313 = sbr.rel (%p311) target = $region56
        $region55: #{tpu_custom_call.1} parent=51 // pred_region
          %s314 = sand.u32 %s141, 1
          %s315 = scalar_lea.sflag [#allocation4], %s314
          %s316 = sand.u32 %s141, 1
          %s317 = smul.addr %s316, 4
          %s318 = scalar_lea.vmem [#allocation7], %s317
          %319 = dma.done %s315, 64
        $region56: #{tpu_custom_call.1} parent=51 // pred_fallthru
          _
      $region52: #{tpu_custom_call.1} parent=5 // pred_fallthru
        _
    $region6: #{tpu_custom_call.1} parent=1 // loop_footer
      %s21 = sadd.s32 1, %s17
    $region7: #{tpu_custom_call.1} parent=1 // loop_footer_branch
      %16 = sbr.rel target = $region3
    $region8: #{tpu_custom_call.1} parent=1 // loop_exit
      _
    %320 = vsyncpa [#allocation3], 1
    %s321 = scalar_lea.sflag [#allocation3], 1
    %322 = vsyncpa %s321, 1
    %323 = vsyncpa [#allocation6], 1
    %324 = vsyncpa [#allocation4], 1
    %s325 = scalar_lea.sflag [#allocation4], 1
    %326 = vsyncpa %s325, 1

</llo_original>
